<compile_context>
chip_gen: v7x
topology: tpu7x:2x2x1
jax: 0.10.0
libtpu: 0.0.40
codegen_flags: <defaults>
</compile_context>

<pallas_src>
import jax
import jax.numpy as jnp
from jax.experimental import pallas as pl
from jax.experimental.pallas import tpu as pltpu


def _swish_kernel(x_ref, o_ref):
    xf = x_ref[...].astype(jnp.float32)
    # Single transcendental, numerically stable over the full range:
    # sigmoid(x) = 0.5 * (tanh(x / 2) + 1)
    sig = 0.5 * (jnp.tanh(0.5 * xf) + 1.0)
    o_ref[...] = (xf * sig).astype(o_ref.dtype)


_WIDTHS = (4096, 2048, 1024, 512, 256, 128)


def _round_up(a, m):
    return ((a + m - 1) // m) * m


def _min_sublanes(dtype):
    # Packed-dtype minimum sublane tile: f32 -> 8, bf16 -> 16, int8/fp8 -> 32.
    itemsize = jnp.dtype(dtype).itemsize
    if itemsize >= 4:
        return 8
    if itemsize == 2:
        return 16
    return 32


def _hw_config():
    """Generation-aware (block_bytes, vmem_limit_bytes, num_cores)."""
    block_bytes = 2 * 1024 * 1024   # safe fallback everywhere
    vmem_limit = None
    num_cores = 1
    try:
        info = pltpu.get_tpu_info()
        vmem_cap = getattr(info, "vmem_capacity_bytes", None)
        for attr in ("num_cores", "core_count", "num_tensorcores"):
            v = getattr(info, attr, None)
            if isinstance(v, int) and v > 0:
                num_cores = v
                break
        if vmem_cap is not None:
            if vmem_cap <= 96 * 1024 * 1024:
                # v7x-class: 64 MiB physical VMEM, very fast HBM -> amortize
                # per-step overhead with big blocks. 8 MiB block * 2 bufs *
                # (in + out) = 32 MiB, well under 48 MiB scoped.
                block_bytes = 8 * 1024 * 1024
                vmem_limit = 48 * 1024 * 1024
            else:
                # v5e / v6e: 128 MiB physical VMEM. 4 MiB blocks = 16 MiB
                # double-buffered; explicitly raise past v5e's 16 MiB default.
                block_bytes = 4 * 1024 * 1024
                vmem_limit = 32 * 1024 * 1024
    except Exception:
        pass
    return block_bytes, vmem_limit, num_cores


def _pick_cols(n, min_sub):
    """Widest lane-dense width (multiple of 128) dividing n; prefer >= min_sub rows."""
    for w in _WIDTHS:
        if n % w == 0 and n // w >= min_sub:
            return w
    for w in _WIDTHS:
        if n % w == 0:
            return w
    return None


def _swish_2d(x2d, block_bytes, vmem_limit, num_cores, min_sub):
    rows, cols = x2d.shape
    itemsize = jnp.dtype(x2d.dtype).itemsize

    if rows <= min_sub:
        # Tiny input: single full-extent block (always legal).
        tr = rows
    else:
        tr = max(min_sub, (block_bytes // (cols * itemsize)) // min_sub * min_sub)
        tr = min(tr, _round_up(rows, min_sub))
        # Multi-TensorCore chips only: force >= 2 steps per core so each core
        # keeps a double-buffered pipeline on the "parallel" split axis.
        if num_cores >= 2:
            min_steps = 2 * num_cores
            if pl.cdiv(rows, tr) < min_steps and rows >= min_steps * min_sub:
                tr = max(min_sub, _round_up(pl.cdiv(rows, min_steps), min_sub))

    grid = (pl.cdiv(rows, tr),)

    cp_kwargs = dict(dimension_semantics=("parallel",))
    if vmem_limit is not None:
        cp_kwargs["vmem_limit_bytes"] = vmem_limit

    return pl.pallas_call(
        _swish_kernel,
        out_shape=jax.ShapeDtypeStruct((rows, cols), x2d.dtype),
        grid_spec=pltpu.PrefetchScalarGridSpec(
            num_scalar_prefetch=0,
            grid=grid,
            in_specs=[pl.BlockSpec((tr, cols), lambda i: (i, 0))],
            out_specs=pl.BlockSpec((tr, cols), lambda i: (i, 0)),
        ),
        compiler_params=pltpu.CompilerParams(**cp_kwargs),
    )(x2d)


def _swish_jnp(x):
    xf = x.astype(jnp.float32)
    return (xf * (0.5 * (jnp.tanh(0.5 * xf) + 1.0))).astype(x.dtype)


def swish(x):
    """Elementwise x * sigmoid(x) (Swish / SiLU) via a Pallas TPU kernel."""
    orig_shape = x.shape
    n = x.size
    if n == 0:
        return x

    block_bytes, vmem_limit, num_cores = _hw_config()
    min_sub = _min_sublanes(x.dtype)
    x_flat = x.reshape(-1)

    cols = _pick_cols(n, min_sub)
    if cols is not None:
        # Fast path: n is a multiple of 128 -> no pad, no slice.
        rows = n // cols
        out2d = _swish_2d(x_flat.reshape(rows, cols),
                          block_bytes, vmem_limit, num_cores, min_sub)
        return out2d.reshape(orig_shape)

    # Ragged path: kernel over the largest 128-aligned prefix, plain jnp for
    # the (<128-element) tail.  Avoids full-array pad + final-slice HBM traffic.
    n_main = (n // 128) * 128
    if n_main == 0:
        return _swish_jnp(x_flat).reshape(orig_shape)
    cols = _pick_cols(n_main, min_sub)
    rows = n_main // cols
    out_main = _swish_2d(x_flat[:n_main].reshape(rows, cols),
                         block_bytes, vmem_limit, num_cores, min_sub).reshape(-1)
    out_tail = _swish_jnp(x_flat[n_main:])
    return jnp.concatenate([out_main, out_tail]).reshape(orig_shape)


if __name__ == "__main__":
    key = jax.random.PRNGKey(0)

    # Small NCHW-style input consistent with a conv-net activation.
    x = jax.random.normal(key, (2, 4, 16, 16), dtype=jnp.float32)
    out = swish(x)
    jax.block_until_ready(out)
    ref = x * jax.nn.sigmoid(x)
    assert out.shape == x.shape and out.dtype == x.dtype
    assert jnp.max(jnp.abs(out - ref)) < 1e-5

    # Ragged-size input (n not a multiple of 128) exercises the prefix+tail path.
    x2 = jax.random.normal(jax.random.PRNGKey(1), (7, 37), dtype=jnp.float32)
    out2 = swish(x2)
    jax.block_until_ready(out2)
    ref2 = x2 * jax.nn.sigmoid(x2)
    assert out2.shape == x2.shape and out2.dtype == x2.dtype
    assert jnp.max(jnp.abs(out2 - ref2)) < 1e-5

    print("KERNEL_OK")
</pallas_src>

<mosaic_0001>
module attributes {stable_mosaic.version = 11 : i64} {
  func.func @_swish_kernel(%arg0: i32, %arg1: memref<8x256xf32, #tpu.memory_space<vmem>>, %arg2: memref<8x256xf32, #tpu.memory_space<vmem>>) attributes {dimension_semantics = [#tpu.dimension_semantics<parallel>], iteration_bounds = array<i64: 1>, scalar_prefetch = 0 : i64, scratch_operands = 0 : i64, tpu.core_type = #tpu.core_type<tc>, window_params = [{transform_indices = @transform_0, window_bounds = array<i64: 8, 256>}, {transform_indices = @transform_1, window_bounds = array<i64: 8, 256>}]} {
    %c0 = arith.constant 0 : index
    %c0_0 = arith.constant 0 : index
    %0 = vector.load %arg1[%c0, %c0_0] : memref<8x256xf32, #tpu.memory_space<vmem>>, vector<8x256xf32>
    %cst = arith.constant 5.000000e-01 : f32
    %1 = vector.broadcast %cst : f32 to vector<8x256xf32>
    %2 = arith.mulf %1, %0 : vector<8x256xf32>
    %3 = math.tanh %2 : vector<8x256xf32>
    %cst_1 = arith.constant 1.000000e+00 : f32
    %4 = vector.broadcast %cst_1 : f32 to vector<8x256xf32>
    %5 = arith.addf %3, %4 : vector<8x256xf32>
    %cst_2 = arith.constant 5.000000e-01 : f32
    %6 = vector.broadcast %cst_2 : f32 to vector<8x256xf32>
    %7 = arith.mulf %6, %5 : vector<8x256xf32>
    %8 = arith.mulf %0, %7 : vector<8x256xf32>
    %c0_3 = arith.constant 0 : index
    %c0_4 = arith.constant 0 : index
    %9 = vector.load %arg2[%c0_3, %c0_4] : memref<8x256xf32, #tpu.memory_space<vmem>>, vector<8x256xf32>
    tpu.vector_store %arg2[%c0_3, %c0_4], %8 {strides = array<i32>} : memref<8x256xf32, #tpu.memory_space<vmem>>, vector<8x256xf32>,
    return
  }
  func.func @transform_0(%arg0: i32) -> (i32, i32) {
    %c0_i32 = arith.constant 0 : i32
    %c0_i32_0 = arith.constant 0 : i32
    return %arg0, %c0_i32 : i32, i32
  }
  func.func @transform_1(%arg0: i32) -> (i32, i32) {
    %c0_i32 = arith.constant 0 : i32
    %c0_i32_0 = arith.constant 0 : i32
    return %arg0, %c0_i32 : i32, i32
  }
}

</mosaic_0001>

<llo_original>
// kernel: tpu_custom_call.1
$region0: #{tpu_custom_call.1}
  #allocation0 [shape = 'u32[]', space=smem, size = 0x4, offset = 0x4, fixed_abs, tag = 'smem constant byte address 0x4 - core index']
  #allocation1 [shape = 'u32[144,128]{1,0:T(1,128)}', space=vmem, size = 0x12000, scoped, tag = 'internal scratch']
  %s0 = inlined_call_operand.hbm [shape: f32[8,256], index: 0, kind: input, shape index: {}]
  %s1 = inlined_call_operand.hbm [shape: f32[8,256], index: 1, kind: output, shape index: {}]
  %s2 = sld [smem:[#allocation0]]
  $region18: #{tpu_custom_call.1} parent=0
    _
  %s4 = ssub.s32 1, %s2
  %s5 = scalar_select 0, %s4, %s2
  $region1: #{tpu_custom_call.1} parent=0
    #allocation2 [shape = 'u8[8192]{0}', space=vmem, size = 0x2000, scoped, tag = 'input window, operand 0, single buffered']
    #allocation3 [shape = 's32[1]{0}', space=sflag, size = 0x4, scoped, tag = 'scoped memory for tpu_custom_call.1']
    #allocation4 [shape = 's32[1]{0}', space=sflag, size = 0x4, scoped, tag = 'scoped memory for tpu_custom_call.1']
    #allocation5 [shape = 'u8[8192]{0}', space=vmem, size = 0x2000, scoped, tag = 'output window, operand 0, single buffered']
    %6 = vsyncpa [#allocation3], 0
    %7 = vsyncpa [#allocation4], 0
    // Predicated region
    $region2: #{tpu_custom_call.1} parent=1 // pred_check
      _
    $region3: #{tpu_custom_call.1} parent=1 // pred_check_branch
      %9 = sbr.rel (0) target = $region5
    $region4: #{tpu_custom_call.1} parent=1 // pred_region
      %s11 = ssub.s32 256, 256
      %12 = vsyncadd [#allocation3], %s11
      %s14 = sshll.u32 [#allocation2], 4
      %s15 = int_to_ptr.vmem [resolvable:$true] %s14
      %17 = dma.hbm_to_vmem [thread:$0]  %s0, 256, %s15, [#allocation3]
    $region5: #{tpu_custom_call.1} parent=1 // pred_fallthru
      _
    // Predicated region
    $region6: #{tpu_custom_call.1} parent=1 // pred_check
      _
    $region7: #{tpu_custom_call.1} parent=1 // pred_check_branch
      %19 = sbr.rel (0) target = $region9
    $region8: #{tpu_custom_call.1} parent=1 // pred_region
      %20 = dma.done [#allocation3], 256
    $region9: #{tpu_custom_call.1} parent=1 // pred_fallthru
      _
    %v21 = vld [vmem:[#allocation2] sm:$0xff]
    %v22 = vld [vmem:[#allocation2 + $0x8] sm:$0xff]
    %v23 = vmul.f32 %v21, 0.5
    %v24 = vmul.f32 %v22, 0.5
    %v25 = vtanh.pop %v23
    %v26 = vtanh.pop %v24
    %v27 = vadd.f32 %v25, 1.0
    %v28 = vadd.f32 %v26, 1.0
    %v29 = vmul.f32 %v27, 0.5
    %v30 = vmul.f32 %v28, 0.5
    %v31 = vmul.f32 %v21, %v29
    %v32 = vmul.f32 %v22, %v30
    %33 = vst [vmem:[#allocation5] sm:$0xff] %v31
    %34 = vst [vmem:[#allocation5 + $0x8] sm:$0xff] %v32
    // Predicated region
    $region10: #{tpu_custom_call.1} parent=1 // pred_check
      _
    $region11: #{tpu_custom_call.1} parent=1 // pred_check_branch
      %36 = sbr.rel (0) target = $region13
    $region12: #{tpu_custom_call.1} parent=1 // pred_region
      %s38 = ssub.s32 256, 256
      %39 = vsyncadd [#allocation4], %s38
      %s41 = sshll.u32 [#allocation5], 4
      %s42 = int_to_ptr.vmem [resolvable:$true] %s41
      %44 = dma.vmem_to_hbm [thread:$0]  %s42, 256, %s1, [#allocation4]
    $region13: #{tpu_custom_call.1} parent=1 // pred_fallthru
      _
    // Predicated region
    $region14: #{tpu_custom_call.1} parent=1 // pred_check
      _
    $region15: #{tpu_custom_call.1} parent=1 // pred_check_branch
      %46 = sbr.rel (0) target = $region17
    $region16: #{tpu_custom_call.1} parent=1 // pred_region
      %47 = dma.done [#allocation4], 256
    $region17: #{tpu_custom_call.1} parent=1 // pred_fallthru
      _
    %48 = vsyncpa [#allocation3], 1
    %49 = vsyncpa [#allocation4], 1

</llo_original>
